<compile_context>
chip_gen: v5e
topology: v5e:2x2
jax: 0.10.0
libtpu: 0.0.40
codegen_flags: <defaults>
</compile_context>

<pallas_src>
import jax
import jax.numpy as jnp
from jax.experimental import pallas as pl
from jax.experimental.pallas import tpu as pltpu


def _tanh3_kernel(x_ref, o_ref):
    # The three interleaved .tanh() calls of the torch module, composed.
    v = x_ref[...]
    v = jnp.tanh(v)           # y = y.tanh()            (after transpose)
    v = jnp.tanh(v)           # y = y.view(...).tanh()
    o_ref[...] = jnp.tanh(v)  # x = y.view(...).tanh()


def _tanh3_pallas(v):
    # Gridless whole-block kernel: entire array lives in VMEM, one invocation,
    # and its output buffer IS the model output (no downstream re-read).
    return pl.pallas_call(
        _tanh3_kernel,
        out_shape=jax.ShapeDtypeStruct(v.shape, v.dtype),
        in_specs=[pl.BlockSpec(memory_space=pltpu.MemorySpace.VMEM)],
        out_specs=pl.BlockSpec(memory_space=pltpu.MemorySpace.VMEM),
    )(v)


@jax.jit
def model_forward(x):
    """JAX/Pallas equivalent of Model.forward.

    x: (2, 3, 4) float32  ->  output: (3, 32) float32
    """
    # ---- Pure index-rearrangement glue on the RAW input (one XLA fusion) ----
    # tanh commutes with this pure permutation/duplication, so hoisting the
    # glue ahead of the fused tanh^3 is exact.
    # x = torch.cat((x, x), dim=0)             -> (4, 3, 4)
    a = jnp.concatenate([x, x], axis=0)
    # y = x.transpose(0, 2)                    -> (4, 3, 4)
    y = jnp.transpose(a, (2, 1, 0))
    # y = y.view(y.shape[1], y.shape[0], -1)   -> (3, 4, 4)
    # NOTE: implemented with logical-order reshape (.contiguous().view)
    # semantics; torch's strict .view on the non-contiguous transpose would
    # have required a contiguous copy anyway.
    y = y.reshape(y.shape[1], y.shape[0], -1)
    # y = torch.cat((y, y), dim=1)             -> (3, 8, 4)
    y = jnp.concatenate([y, y], axis=1)
    # x = y.view(y.shape[0], -1)               -> (3, 32)
    pre = y.reshape(y.shape[0], -1)

    # ---- Single Pallas dispatch: tanh^3 writes the final (3, 32) output ----
    return _tanh3_pallas(pre)


if __name__ == "__main__":
    key = jax.random.PRNGKey(0)
    x = jax.random.normal(key, (2, 3, 4), dtype=jnp.float32)

    out = model_forward(x)
    jax.block_until_ready(out)

    # Pure-JAX reference with the tanhs in their ORIGINAL positions
    # (after transpose, after first view, after final view) to verify that
    # hoisting the glue ahead of the fused tanh^3 is exact.
    a = jnp.concatenate([x, x], axis=0)
    yr = jnp.tanh(jnp.transpose(a, (2, 1, 0)))
    yr = jnp.tanh(yr.reshape(yr.shape[1], yr.shape[0], -1))
    yr = jnp.concatenate([yr, yr], axis=1)
    ref = jnp.tanh(yr.reshape(yr.shape[0], -1))

    assert out.shape == (3, 32)
    assert jnp.allclose(out, ref, atol=1e-6)

    print("KERNEL_OK")
</pallas_src>

<mosaic_0001>
module attributes {stable_mosaic.version = 11 : i64} {
  func.func @_tanh3_kernel(%arg0: memref<3x32xf32, #tpu.memory_space<vmem>>, %arg1: memref<3x32xf32, #tpu.memory_space<vmem>>) attributes {dimension_semantics = [], scalar_prefetch = 0 : i64, scratch_operands = 0 : i64, tpu.core_type = #tpu.core_type<tc>} {
    %c0 = arith.constant 0 : index
    %c0_0 = arith.constant 0 : index
    %0 = vector.load %arg0[%c0, %c0_0] : memref<3x32xf32, #tpu.memory_space<vmem>>, vector<3x32xf32>
    %1 = math.tanh %0 : vector<3x32xf32>
    %2 = math.tanh %1 : vector<3x32xf32>
    %3 = math.tanh %2 : vector<3x32xf32>
    %c0_1 = arith.constant 0 : index
    %c0_2 = arith.constant 0 : index
    %4 = vector.load %arg1[%c0_1, %c0_2] : memref<3x32xf32, #tpu.memory_space<vmem>>, vector<3x32xf32>
    tpu.vector_store %arg1[%c0_1, %c0_2], %3 {strides = array<i32>} : memref<3x32xf32, #tpu.memory_space<vmem>>, vector<3x32xf32>,
    return
  }
}

</mosaic_0001>

<llo_original>
// kernel: model_forward.1
$region0: #{model_forward.1}
  #allocation0 [shape = 'u32[]', space=smem, size = 0x4, offset = 0x4, fixed_abs, tag = 'smem constant byte address 0x4 - core index']
  #allocation1 [shape = 'u32[72,128]{1,0:T(1,128)}', space=vmem, size = 0x9000, scoped, tag = 'internal scratch']
  %s0 = inlined_call_operand.vmem [shape: f32[3,32], index: 0, kind: input, shape index: {}]
  %s1 = inlined_call_operand.hbm [shape: f32[3,32], index: 1, kind: output, shape index: {}]
  %s2 = sld [smem:[#allocation0]]
  $region14: #{model_forward.1} parent=0
    _
  %s4 = ssub.s32 1, %s2
  %s5 = scalar_select 0, %s4, %s2
  $region1: #{model_forward.1} parent=0
    #allocation2 [shape = 'u8[2048]{0}', space=vmem, size = 0x800, scoped, tag = 'output window, operand 0, single buffered']
    #allocation3 [shape = 's32[1]{0}', space=sflag, size = 0x4, scoped, tag = 'scoped memory for model_forward.1']
    %6 = vsyncpa [#allocation3], 0
    // Predicated region
    $region2: #{model_forward.1} parent=1 // pred_check
      _
    $region3: #{model_forward.1} parent=1 // pred_check_branch
      %8 = sbr.rel (0) target = $region5
    $region4: #{model_forward.1} parent=1 // pred_region
      _
    $region5: #{model_forward.1} parent=1 // pred_fallthru
      _
    %v9 = vld [vmem:[%s0] sm:$0x7]
    %v10 = vtanh.pop %v9
    %v11 = vtanh.pop %v10
    %v12 = vtanh.pop %v11
    %vm13 = vcmask 256000
    %14 = vst.msk [vmem:[#allocation2] sm:$0x7] %vm13, %v12
    // Predicated region
    $region6: #{model_forward.1} parent=1 // pred_check
      _
    $region7: #{model_forward.1} parent=1 // pred_check_branch
      %16 = sbr.rel (0) target = $region9
    $region8: #{model_forward.1} parent=1 // pred_region
      %18 = vsyncadd [#allocation3], 0
      %s20 = sshll.u32 [#allocation2], 4
      %s21 = int_to_ptr.vmem [resolvable:$true] %s20
      %s22 = sshll.u32 %s1, 4
      %s23 = int_to_ptr.hbm [resolvable:$true] %s22
      %25 = dma.vmem_to_hbm [thread:$0]  %s21, 64, %s23, [#allocation3]
    $region9: #{model_forward.1} parent=1 // pred_fallthru
      _
    // Predicated region
    $region10: #{model_forward.1} parent=1 // pred_check
      _
    $region11: #{model_forward.1} parent=1 // pred_check_branch
      %27 = sbr.rel (0) target = $region13
    $region12: #{model_forward.1} parent=1 // pred_region
      %29 = dma.done [#allocation3], 64
    $region13: #{model_forward.1} parent=1 // pred_fallthru
      _
    %30 = vsyncpa [#allocation3], 1

</llo_original>
